<compile_context>
chip_gen: v7x
topology: tpu7x:2x2x1
jax: 0.10.0
libtpu: 0.0.40
codegen_flags: <defaults>
</compile_context>

<pallas_src>
import math

import jax
import jax.numpy as jnp
from jax.experimental import pallas as pl
from jax.experimental.pallas import tpu as pltpu


# --------------------------------------------------------------------------- #
# Positional-encoding table (matches the PyTorch buffer init).
# --------------------------------------------------------------------------- #
def _make_pe(d_model: int, max_len: int = 500, dtype=jnp.float32) -> jnp.ndarray:
    """Sinusoidal positional-encoding table, matching the PyTorch buffer init."""
    if d_model <= 0:
        raise ValueError("d_model must be positive")
    max_len = max(1, max_len)
    position = jnp.arange(max_len, dtype=jnp.float32)[:, None]               # [max_len, 1]
    div_term = jnp.exp(
        jnp.arange(0, d_model, 2, dtype=jnp.float32) * (-math.log(10000.0) / d_model)
    )                                                                        # [ceil(d/2)]
    angles = position * div_term                                             # [max_len, ceil(d/2)]
    pe = jnp.zeros((max_len, d_model), dtype=jnp.float32)
    pe = pe.at[:, 0::2].set(jnp.sin(angles))
    if d_model % 2 == 0:
        pe = pe.at[:, 1::2].set(jnp.cos(angles))
    else:
        pe = pe.at[:, 1::2].set(jnp.cos(angles[:, : (d_model // 2)]))
    return pe[None].astype(dtype)                                            # [1, max_len, d_model]


# --------------------------------------------------------------------------- #
# Kernel body.
# --------------------------------------------------------------------------- #
def _add_pe_kernel(x_ref, pe_ref, o_ref):
    # x_ref / o_ref: (B, TC) lane-dense slab; pe_ref: (1, TC) broadcast over batch rows.
    # Accumulate in f32 (pe is kept in its native f32), cast once on store.
    o_ref[...] = (
        x_ref[...].astype(jnp.float32) + pe_ref[...].astype(jnp.float32)
    ).astype(o_ref.dtype)


# --------------------------------------------------------------------------- #
# Tiling / tuning helpers.
# --------------------------------------------------------------------------- #
def _round_up(a: int, b: int) -> int:
    return -(-a // b) * b


def _default_tuning():
    """(target_block_bytes, vmem_budget_bytes, vmem_limit_bytes, min_tiles) per generation."""
    target = 2 << 20           # 2 MiB padded x-block: safe & near-roofline on v5e
    budget = 12 << 20          # fits v5e's 16 MiB scoped-VMEM default with headroom
    limit = 32 << 20
    min_tiles = 1
    kind = ""
    try:
        kind = jax.devices()[0].device_kind.lower()
    except Exception:
        pass
    vmem_cap = 0
    try:
        vmem_cap = int(getattr(pltpu.get_tpu_info(), "vmem_capacity_bytes", 0) or 0)
    except Exception:
        pass
    if "v7" in kind or (0 < vmem_cap <= (64 << 20)):
        # v7x: 2 TensorCores / 3.2 TB/s HBM / 64 MiB VMEM per TC -> bigger blocks,
        # and make sure both cores get column tiles.
        target, budget, limit, min_tiles = 4 << 20, 24 << 20, 32 << 20, 2
    elif "v6" in kind:
        # v6e: 1.4 TB/s HBM / 128 MiB VMEM -> slightly larger blocks are free.
        target, budget, limit, min_tiles = 4 << 20, 24 << 20, 32 << 20, 1
    return target, budget, limit, min_tiles


def _choose_col_tile(n_cols: int, batch: int, x_itemsize: int, pe_itemsize: int,
                     target_block_bytes: int, vmem_budget_bytes: int,
                     min_tiles: int = 1) -> int:
    """Lane-dense column tile: a multiple of 128 columns (or the full width) sized
    with sublane-padding-aware VMEM accounting of the whole pipelined footprint."""
    if n_cols <= 128:
        return n_cols

    pack_x = max(8, 32 // x_itemsize)          # sublane pack: 8 f32 / 16 bf16 / 32 int8
    pack_pe = max(8, 32 // pe_itemsize)
    padded_b = _round_up(batch, pack_x)

    # VMEM bytes per column of tile: double-buffered x block + double-buffered out
    # block (both at padded row count) + double-buffered pe tile (padded to a full
    # sublane group even though it is logically 1 row).
    bytes_per_col = 2 * (2 * padded_b * x_itemsize + pack_pe * pe_itemsize)

    vmem_cap = (vmem_budget_bytes // bytes_per_col) // 128 * 128
    tgt_cap = (target_block_bytes // (padded_b * x_itemsize)) // 128 * 128
    cap = max(128, min(vmem_cap, tgt_cap))

    # v7x: guarantee >= min_tiles column tiles so both TensorCores get work.
    want_split = min_tiles > 1 and (n_cols // min_tiles) >= 128
    if want_split:
        cap = max(128, min(cap, (n_cols // min_tiles) // 128 * 128))

    # Single full-width tile when everything fits and no multi-core split is needed.
    if (not want_split
            and n_cols * bytes_per_col <= vmem_budget_bytes
            and padded_b * n_cols * x_itemsize <= target_block_bytes):
        return n_cols
    if cap >= n_cols:
        return n_cols

    # Prefer a tile that evenly divides n_cols (no ragged masked last store); among
    # those, prefer a tile count that is a multiple of min_tiles (balanced TC split).
    # Never shrink below ~cap/2 just for evenness.
    if n_cols % 128 == 0:
        m = n_cols // 128
        d_hi = cap // 128
        d_lo = max(1, d_hi // 2)
        best = best_any = None
        for d in range(d_hi, d_lo - 1, -1):
            if m % d == 0:
                if best_any is None:
                    best_any = d
                if (m // d) % max(1, min_tiles) == 0:
                    best = d
                    break
        d_sel = best if best is not None else best_any
        if d_sel is not None:
            return d_sel * 128
    return cap


# --------------------------------------------------------------------------- #
# pe preprocessing cache (hoist slice+reshape out of steady-state calls).
# --------------------------------------------------------------------------- #
_PE_FLAT_CACHE = {}


def _is_tracer(a) -> bool:
    try:
        return isinstance(a, jax.core.Tracer)
    except Exception:
        return True            # be conservative: just skip caching


def _prepare_pe_flat(pe: jnp.ndarray, s: int, d: int) -> jnp.ndarray:
    """pe[:, :s, :] flattened to [1, s*d], cached per (pe buffer, seq_len) so eager
    steady-state calls pay zero extra HBM traffic for the slice/reshape."""
    if _is_tracer(pe):
        return pe[:, :s, :].reshape(1, s * d)
    key = (id(pe), s, d)
    hit = _PE_FLAT_CACHE.get(key)
    if hit is not None and hit[0] is pe:
        return hit[1]
    pe_flat = pe[:, :s, :].reshape(1, s * d)
    if len(_PE_FLAT_CACHE) > 32:     # keep the cache (and the pe refs it pins) bounded
        _PE_FLAT_CACHE.clear()
    _PE_FLAT_CACHE[key] = (pe, pe_flat)
    return pe_flat


# --------------------------------------------------------------------------- #
# Public forward.
# --------------------------------------------------------------------------- #
def positional_encoding_forward(
    x: jnp.ndarray,
    pe: jnp.ndarray,
    *,
    target_block_bytes: int | None = None,   # default: per-generation (2 MiB v5e, 4 MiB v6e/v7x)
    vmem_budget_bytes: int | None = None,    # default: per-generation (12 / 24 MiB)
    min_pallas_bytes: int = 256 * 1024,      # below this a fused XLA add wins on launch overhead
    donate_x: bool = False,                  # only alias x->out when the caller really donates x
) -> jnp.ndarray:
    """x: [B, S, D]; pe: [1, max_len, D].  Returns x + pe[:, :S] (eval-mode dropout = identity)."""
    b, s, d = x.shape
    if s > pe.shape[1]:
        raise ValueError(
            f"input seq_len ({s}) exceeds PositionalEncoding max_len ({pe.shape[1]})."
        )

    x_itemsize = jnp.dtype(x.dtype).itemsize
    pe_itemsize = jnp.dtype(pe.dtype).itemsize
    n = s * d

    tgt_default, budget_default, vmem_limit, min_tiles = _default_tuning()
    if target_block_bytes is None:
        target_block_bytes = tgt_default
    if vmem_budget_bytes is None:
        vmem_budget_bytes = budget_default

    pe_flat = _prepare_pe_flat(pe, s, d)                                     # [1, S*D], f32

    if b * n * x_itemsize < min_pallas_bytes:
        # Tiny inputs: pallas_call launch + pipeline prologue dominates -> fused XLA add.
        out = x.astype(jnp.float32) + pe_flat.reshape(1, s, d).astype(jnp.float32)
        return out.astype(x.dtype)

    # Lane-dense 2-D views: last dim = S*D so stores are wide, unmasked vector stores.
    x_flat = x.reshape(b, n)                                                 # [B, S*D]

    tc = _choose_col_tile(n, b, x_itemsize, pe_itemsize,
                          target_block_bytes, vmem_budget_bytes, min_tiles)
    grid = (pl.cdiv(n, tc),)

    call_kwargs = {}
    if donate_x:
        # Safe (disjoint tile reads/writes); only enable when x is actually donated
        # at the jit boundary, otherwise XLA would insert a defensive full copy.
        call_kwargs["input_output_aliases"] = {0: 0}

    out_flat = pl.pallas_call(
        _add_pe_kernel,
        out_shape=jax.ShapeDtypeStruct((b, n), x.dtype),
        grid_spec=pl.GridSpec(
            grid=grid,
            in_specs=[
                pl.BlockSpec((b, tc), lambda c: (0, c)),   # all batch rows, one column tile
                pl.BlockSpec((1, tc), lambda c: (0, c)),   # matching pe tile, fetched once per tile
            ],
            out_specs=pl.BlockSpec((b, tc), lambda c: (0, c)),
        ),
        compiler_params=pltpu.CompilerParams(
            dimension_semantics=("parallel",),             # v7x: 2 TensorCores split column tiles
            vmem_limit_bytes=vmem_limit,
        ),
        cost_estimate=pl.CostEstimate(
            flops=b * n,
            transcendentals=0,
            bytes_accessed=2 * b * n * x_itemsize + n * pe_itemsize,  # read x + write out + read pe once
        ),
        **call_kwargs,
    )(x_flat, pe_flat)

    return out_flat.reshape(b, s, d)


# --------------------------------------------------------------------------- #
# Demo / self-test.
# --------------------------------------------------------------------------- #
if __name__ == "__main__":
    key = jax.random.PRNGKey(0)
    k1, k2, k3, k4, k5 = jax.random.split(key, 5)
    max_len = 500

    # --- 1. small case (module layout [batch, seq_len, d_model]); force the Pallas path ---
    batch, seq_len, d_model = 2, 8, 32
    x = jax.random.normal(k1, (batch, seq_len, d_model), dtype=jnp.float32)
    pe = _make_pe(d_model, max_len=max_len)
    ref = x + pe[:, :seq_len, :]
    out = jax.block_until_ready(positional_encoding_forward(x, pe, min_pallas_bytes=0))
    assert out.shape == (batch, seq_len, d_model)
    assert jnp.allclose(out, ref, atol=1e-6), "mismatch vs reference (small case)"

    # --- 2. multi-tile grid with an evenly-dividing column tile ---
    b2, s2, d2 = 4, 96, 64
    x2 = jax.random.normal(k2, (b2, s2, d2), dtype=jnp.float32)
    pe2 = _make_pe(d2, max_len=max_len)
    ref2 = x2 + pe2[:, :s2, :]
    out2 = jax.block_until_ready(
        positional_encoding_forward(x2, pe2, target_block_bytes=64 * 1024, min_pallas_bytes=0)
    )
    assert jnp.allclose(out2, ref2, atol=1e-6), "mismatch vs reference (even-tile case)"

    # --- 3. ragged last tile (n = S*D not a multiple of 128) ---
    b3, s3, d3 = 2, 10, 24
    x3 = jax.random.normal(k3, (b3, s3, d3), dtype=jnp.float32)
    pe3 = _make_pe(d3, max_len=max_len)
    ref3 = x3 + pe3[:, :s3, :]
    out3 = jax.block_until_ready(
        positional_encoding_forward(x3, pe3, target_block_bytes=4096, min_pallas_bytes=0)
    )
    assert jnp.allclose(out3, ref3, atol=1e-6), "mismatch vs reference (ragged-tile case)"

    # --- 4. larger case going through the per-generation defaults ---
    b4, s4, d4 = 8, 256, 128
    x4 = jax.random.normal(k4, (b4, s4, d4), dtype=jnp.float32)
    pe4 = _make_pe(d4, max_len=max_len)
    ref4 = x4 + pe4[:, :s4, :]
    out4 = jax.block_until_ready(positional_encoding_forward(x4, pe4))
    assert jnp.allclose(out4, ref4, atol=1e-6), "mismatch vs reference (default-tuning case)"

    # --- 5. bf16 activations + f32 pe: add in f32 inside the kernel, cast on store ---
    b5, s5, d5 = 2, 32, 64
    x5 = jax.random.normal(k5, (b5, s5, d5), dtype=jnp.bfloat16)
    pe5 = _make_pe(d5, max_len=max_len)
    ref5 = (x5.astype(jnp.float32) + pe5[:, :s5, :]).astype(jnp.bfloat16)
    out5 = jax.block_until_ready(positional_encoding_forward(x5, pe5, min_pallas_bytes=0))
    assert out5.dtype == jnp.bfloat16
    assert jnp.allclose(out5.astype(jnp.float32), ref5.astype(jnp.float32),
                        atol=1e-2, rtol=1e-2), "mismatch vs reference (bf16 case)"

    print("KERNEL_OK")
</pallas_src>

<mosaic_0001>
module attributes {stable_mosaic.version = 11 : i64} {
  func.func @_add_pe_kernel(%arg0: i32, %arg1: memref<2x256xf32, #tpu.memory_space<vmem>>, %arg2: memref<1x256xf32, #tpu.memory_space<vmem>>, %arg3: memref<2x256xf32, #tpu.memory_space<vmem>>) attributes {dimension_semantics = [#tpu.dimension_semantics<parallel>], iteration_bounds = array<i64: 1>, scalar_prefetch = 0 : i64, scratch_operands = 0 : i64, tpu.core_type = #tpu.core_type<tc>, window_params = [{transform_indices = @transform_0, window_bounds = array<i64: 2, 256>}, {transform_indices = @transform_1, window_bounds = array<i64: 1, 256>}, {transform_indices = @transform_2, window_bounds = array<i64: 2, 256>}]} {
    %c0 = arith.constant 0 : index
    %c0_0 = arith.constant 0 : index
    %0 = vector.load %arg1[%c0, %c0_0] : memref<2x256xf32, #tpu.memory_space<vmem>>, vector<2x256xf32>
    %c0_1 = arith.constant 0 : index
    %c0_2 = arith.constant 0 : index
    %1 = vector.load %arg2[%c0_1, %c0_2] : memref<1x256xf32, #tpu.memory_space<vmem>>, vector<1x256xf32>
    %2 = vector.broadcast %1 : vector<1x256xf32> to vector<2x256xf32>
    %3 = arith.addf %0, %2 : vector<2x256xf32>
    %c0_3 = arith.constant 0 : index
    %c0_4 = arith.constant 0 : index
    %4 = vector.load %arg3[%c0_3, %c0_4] : memref<2x256xf32, #tpu.memory_space<vmem>>, vector<2x256xf32>
    tpu.vector_store %arg3[%c0_3, %c0_4], %3 {strides = array<i32>} : memref<2x256xf32, #tpu.memory_space<vmem>>, vector<2x256xf32>,
    return
  }
  func.func @transform_0(%arg0: i32) -> (i32, i32) {
    %c0_i32 = arith.constant 0 : i32
    %c0_i32_0 = arith.constant 0 : i32
    return %c0_i32, %arg0 : i32, i32
  }
  func.func @transform_1(%arg0: i32) -> (i32, i32) {
    %c0_i32 = arith.constant 0 : i32
    %c0_i32_0 = arith.constant 0 : i32
    return %c0_i32, %arg0 : i32, i32
  }
  func.func @transform_2(%arg0: i32) -> (i32, i32) {
    %c0_i32 = arith.constant 0 : i32
    %c0_i32_0 = arith.constant 0 : i32
    return %c0_i32, %arg0 : i32, i32
  }
}

</mosaic_0001>

<llo_original>
// kernel: tpu_custom_call.1
$region0: #{tpu_custom_call.1}
  #allocation0 [shape = 'u32[]', space=smem, size = 0x4, offset = 0x4, fixed_abs, tag = 'smem constant byte address 0x4 - core index']
  #allocation1 [shape = 'u32[144,128]{1,0:T(1,128)}', space=vmem, size = 0x12000, scoped, tag = 'internal scratch']
  %s0 = inlined_call_operand.hbm [shape: f32[2,256], index: 0, kind: input, shape index: {}]
  %s1 = inlined_call_operand.vmem [shape: f32[1,256], index: 1, kind: input, shape index: {}]
  %s2 = inlined_call_operand.hbm [shape: f32[2,256], index: 2, kind: output, shape index: {}]
  %s3 = sld [smem:[#allocation0]]
  $region22: #{tpu_custom_call.1} parent=0
    _
  %s5 = ssub.s32 1, %s3
  %s6 = scalar_select 0, %s5, %s3
  $region1: #{tpu_custom_call.1} parent=0
    #allocation2 [shape = 'u8[2048]{0}', space=vmem, size = 0x800, scoped, tag = 'input window, operand 0, single buffered']
    #allocation3 [shape = 's32[1]{0}', space=sflag, size = 0x4, scoped, tag = 'scoped memory for tpu_custom_call.1']
    #allocation4 [shape = 's32[1]{0}', space=sflag, size = 0x4, scoped, tag = 'scoped memory for tpu_custom_call.1']
    #allocation5 [shape = 'u8[2048]{0}', space=vmem, size = 0x800, scoped, tag = 'output window, operand 0, single buffered']
    %7 = vsyncpa [#allocation3], 0
    %8 = vsyncpa [#allocation4], 0
    // Predicated region
    $region2: #{tpu_custom_call.1} parent=1 // pred_check
      _
    $region3: #{tpu_custom_call.1} parent=1 // pred_check_branch
      %10 = sbr.rel (0) target = $region5
    $region4: #{tpu_custom_call.1} parent=1 // pred_region
      %s12 = ssub.s32 64, 64
      %13 = vsyncadd [#allocation3], %s12
      %s15 = sshll.u32 [#allocation2], 4
      %s16 = int_to_ptr.vmem [resolvable:$true] %s15
      %18 = dma.hbm_to_vmem [thread:$0]  %s0, 64, %s16, [#allocation3]
    $region5: #{tpu_custom_call.1} parent=1 // pred_fallthru
      _
    // Predicated region
    $region6: #{tpu_custom_call.1} parent=1 // pred_check
      _
    $region7: #{tpu_custom_call.1} parent=1 // pred_check_branch
      %20 = sbr.rel (0) target = $region9
    $region8: #{tpu_custom_call.1} parent=1 // pred_region
      _
    $region9: #{tpu_custom_call.1} parent=1 // pred_fallthru
      _
    // Predicated region
    $region10: #{tpu_custom_call.1} parent=1 // pred_check
      _
    $region11: #{tpu_custom_call.1} parent=1 // pred_check_branch
      %22 = sbr.rel (0) target = $region13
    $region12: #{tpu_custom_call.1} parent=1 // pred_region
      %23 = dma.done [#allocation3], 64
    $region13: #{tpu_custom_call.1} parent=1 // pred_fallthru
      _
    %v24 = vld [vmem:[#allocation2] sm:$0xf]
    %v25 = vld [vmem:[%s1] sm:$0x3]
    %v27 = vlaneseq
    %v28 = vshrl.u32 %v27, 7
    %v29 = vsub.s32 0, %v28
    %v30 = vrot.slane %v25, %v29
    %v31 = vlaneseq
    %v32 = vshrl.u32 %v31, 7
    %v33 = vsub.s32 1, %v32
    %v34 = vrot.slane %v25, %v33
    %v35 = vcombine.low %v30, %v34
    %v37 = vunpack.c.l.s4 1983009808
    %v38 = vunpack.c.0.s8 %v37
    %v39 = vlaneseq
    %v40 = vshrl.u32 %v39, 7
    %v41 = vsub.s32 %v38, %v40
    %v42 = vrot.slane %v35, %v41
    %v44 = vadd.f32 %v24, %v42
    %45 = vst [vmem:[#allocation5] sm:$0xf] %v44
    // Predicated region
    $region14: #{tpu_custom_call.1} parent=1 // pred_check
      _
    $region15: #{tpu_custom_call.1} parent=1 // pred_check_branch
      %47 = sbr.rel (0) target = $region17
    $region16: #{tpu_custom_call.1} parent=1 // pred_region
      %s49 = ssub.s32 64, 64
      %50 = vsyncadd [#allocation4], %s49
      %s52 = sshll.u32 [#allocation5], 4
      %s53 = int_to_ptr.vmem [resolvable:$true] %s52
      %55 = dma.vmem_to_hbm [thread:$0]  %s53, 64, %s2, [#allocation4]
    $region17: #{tpu_custom_call.1} parent=1 // pred_fallthru
      _
    // Predicated region
    $region18: #{tpu_custom_call.1} parent=1 // pred_check
      _
    $region19: #{tpu_custom_call.1} parent=1 // pred_check_branch
      %57 = sbr.rel (0) target = $region21
    $region20: #{tpu_custom_call.1} parent=1 // pred_region
      %58 = dma.done [#allocation4], 64
    $region21: #{tpu_custom_call.1} parent=1 // pred_fallthru
      _
    %59 = vsyncpa [#allocation3], 1
    %60 = vsyncpa [#allocation4], 1

</llo_original>
